<compile_context>
chip_gen: v7x
topology: tpu7x:2x2x1
jax: 0.10.0
libtpu: 0.0.40
codegen_flags: <defaults>
</compile_context>

<pallas_src>
import functools

import jax
import jax.numpy as jnp
from jax.experimental import pallas as pl
from jax.experimental.pallas import tpu as pltpu


def _router_kernel(x_ref, w_ref, b_ref, probs_ref, logits_ref, *, inv_temperature):
    # x_ref: (TB, D) bf16, w_ref: (D, Ep) bf16, b_ref: (1, Ep) f32
    # Native-dtype operands into the MXU, f32 accumulation.
    logits = jnp.dot(x_ref[...], w_ref[...], preferred_element_type=jnp.float32)
    logits = logits + b_ref[...]
    logits_ref[...] = logits.astype(logits_ref.dtype)

    # Temperature-scaled softmax along the expert axis (f32 throughout).
    scaled = logits * inv_temperature
    m = jnp.max(scaled, axis=1, keepdims=True)
    e = jnp.exp(scaled - m)
    denom = jnp.sum(e, axis=1, keepdims=True)
    # Exact f32 divide: rows must sum to 1 within f32 rounding (the approximate
    # EUP reciprocal is not accurate enough for that guarantee).
    probs = e / denom
    probs_ref[...] = probs.astype(probs_ref.dtype)


def router_forward(x, weight_t, bias, temperature=1.0, block_b=None):
    """x: (B, D); weight_t: (D, E); bias: (E,). Returns (probs, logits), both (B, E) f32."""
    B, D = x.shape
    E = weight_t.shape[1]

    # ---- lane-dense expert axis: pad E up to a multiple of 128 ----
    E_pad = max(128, -(-E // 128) * 128)
    if E_pad != E:
        weight_t = jnp.pad(weight_t, ((0, 0), (0, E_pad - E)))
        # Padded experts get a very negative bias: exp() underflows to 0, they
        # never win the max, and their columns are sliced off afterwards.
        bias = jnp.concatenate(
            [bias, jnp.full((E_pad - E,), -1e30, dtype=bias.dtype)]
        )

    # ---- batch tiling ----
    if block_b is None:
        # Sized so 2x(bf16 x tile) + resident W + 2x2x(f32 out tiles) stays well
        # under the v7x 64 MiB VMEM budget even at D ~ 4096; v5e/v6e have slack.
        block_b = 512
    TB = min(block_b, max(8, -(-B // 8) * 8))
    B_pad = -(-B // TB) * TB
    if B_pad != B:
        x = jnp.pad(x, ((0, B_pad - B), (0, 0)))

    # bf16 operands into the MXU halves HBM traffic on the dominant x stream.
    x_in = x.astype(jnp.bfloat16)
    w_in = weight_t.astype(jnp.bfloat16)
    b_in = bias.astype(jnp.float32).reshape(1, E_pad)

    kernel = functools.partial(
        _router_kernel, inv_temperature=1.0 / float(temperature)
    )

    # VMEM estimate: double-buffered x tile + resident W + bias + 2 double-buffered outs.
    est = (2 * TB * D * 2) + (D * E_pad * 2) + (E_pad * 4) + (2 * 2 * TB * E_pad * 4)
    vmem_limit = int(min(max(2 * est, 16 * 1024 * 1024), 48 * 1024 * 1024))

    probs, logits = pl.pallas_call(
        kernel,
        out_shape=(
            jax.ShapeDtypeStruct((B_pad, E_pad), jnp.float32),
            jax.ShapeDtypeStruct((B_pad, E_pad), jnp.float32),
        ),
        grid_spec=pltpu.PrefetchScalarGridSpec(
            num_scalar_prefetch=0,
            grid=(B_pad // TB,),
            in_specs=[
                pl.BlockSpec((TB, D), lambda i: (i, 0)),      # x: streamed per tile
                pl.BlockSpec((D, E_pad), lambda i: (0, 0)),   # W: VMEM resident
                pl.BlockSpec((1, E_pad), lambda i: (0, 0)),   # bias: VMEM resident
            ],
            out_specs=[
                pl.BlockSpec((TB, E_pad), lambda i: (i, 0)),
                pl.BlockSpec((TB, E_pad), lambda i: (i, 0)),
            ],
        ),
        compiler_params=pltpu.CompilerParams(
            dimension_semantics=("parallel",),  # independent batch tiles -> megacore on v7x
            vmem_limit_bytes=vmem_limit,
        ),
    )(x_in, w_in, b_in)

    # Strip batch / expert padding.
    return probs[:B, :E], logits[:B, :E]


def xavier_uniform(key, fan_out, fan_in, dtype=jnp.float32):
    # Matches nn.init.xavier_uniform_ for a Linear weight of shape (out, in).
    limit = (6.0 / (fan_in + fan_out)) ** 0.5
    return jax.random.uniform(
        key, (fan_out, fan_in), minval=-limit, maxval=limit, dtype=dtype
    )


if __name__ == "__main__":
    # Small synthetic config: concatenated expert features D=96, E=5 experts,
    # batch B=13 (deliberately non-aligned to exercise batch/expert padding).
    B, D, E = 13, 96, 5
    temperature = 0.7

    key = jax.random.PRNGKey(0)
    kx, kw = jax.random.split(key)

    x = jax.random.normal(kx, (B, D), dtype=jnp.float32)
    w = xavier_uniform(kw, E, D)             # PyTorch Linear weight layout: (out, in)
    b = jnp.zeros((E,), dtype=jnp.float32)   # biases initialized to zero

    probs, logits = router_forward(x, w.T, b, temperature=temperature)
    jax.block_until_ready((probs, logits))

    # Reference computed with the same bf16-rounded MXU operands (f32 accumulation).
    xb = x.astype(jnp.bfloat16).astype(jnp.float32)
    wb = w.astype(jnp.bfloat16).astype(jnp.float32)
    ref_logits = xb @ wb.T + b
    ref_probs = jax.nn.softmax(ref_logits / temperature, axis=1)

    assert probs.shape == (B, E) and logits.shape == (B, E), "output shape mismatch"
    assert jnp.allclose(logits, ref_logits, atol=1e-4, rtol=1e-4), "logits mismatch"
    # bf16 operands -> slightly looser tolerance for probs vs bf16-rounded ref.
    assert jnp.allclose(probs, ref_probs, atol=2e-3, rtol=2e-3), "probs mismatch"
    # Exact f32 normalization inside the kernel -> tight row-sum check.
    assert jnp.allclose(jnp.sum(probs, axis=1), 1.0, atol=1e-4), "probs not normalized"

    # Loose sanity check vs the full-f32 reference (pure bf16 rounding error).
    full_ref = jax.nn.softmax((x @ w.T + b) / temperature, axis=1)
    assert jnp.allclose(probs, full_ref, atol=5e-2), "probs far from f32 reference"

    print("KERNEL_OK")
</pallas_src>

<mosaic_0001>
module attributes {stable_mosaic.version = 11 : i64} {
  func.func @_router_kernel(%arg0: i32, %arg1: memref<16x96xbf16, #tpu.memory_space<vmem>>, %arg2: memref<96x128xbf16, #tpu.memory_space<vmem>>, %arg3: memref<1x128xf32, #tpu.memory_space<vmem>>, %arg4: memref<16x128xf32, #tpu.memory_space<vmem>>, %arg5: memref<16x128xf32, #tpu.memory_space<vmem>>) attributes {dimension_semantics = [#tpu.dimension_semantics<parallel>], iteration_bounds = array<i64: 1>, scalar_prefetch = 0 : i64, scratch_operands = 0 : i64, tpu.core_type = #tpu.core_type<tc>, window_params = [{transform_indices = @transform_0, window_bounds = array<i64: 16, 96>}, {pipeline_mode = #tpu.pipeline_mode<synchronous>, transform_indices = @transform_1, window_bounds = array<i64: 96, 128>}, {pipeline_mode = #tpu.pipeline_mode<synchronous>, transform_indices = @transform_2, window_bounds = array<i64: 1, 128>}, {transform_indices = @transform_3, window_bounds = array<i64: 16, 128>}, {transform_indices = @transform_4, window_bounds = array<i64: 16, 128>}]} {
    %c0 = arith.constant 0 : index
    %c0_0 = arith.constant 0 : index
    %0 = vector.load %arg1[%c0, %c0_0] : memref<16x96xbf16, #tpu.memory_space<vmem>>, vector<16x96xbf16>
    %c0_1 = arith.constant 0 : index
    %c0_2 = arith.constant 0 : index
    %1 = vector.load %arg2[%c0_1, %c0_2] : memref<96x128xbf16, #tpu.memory_space<vmem>>, vector<96x128xbf16>
    %cst = arith.constant dense<0.000000e+00> : vector<16x128xf32>
    %2 = tpu.matmul %0, %1, %cst {dimension_numbers = #tpu.dot_dimension_numbers<[1], [0], [0], [1], [0, 0, 1, 1], [], []>} : vector<16x96xbf16>, vector<96x128xbf16>, vector<16x128xf32> -> vector<16x128xf32>
    %c0_3 = arith.constant 0 : index
    %c0_4 = arith.constant 0 : index
    %3 = vector.load %arg3[%c0_3, %c0_4] : memref<1x128xf32, #tpu.memory_space<vmem>>, vector<1x128xf32>
    %4 = vector.broadcast %3 : vector<1x128xf32> to vector<16x128xf32>
    %5 = arith.addf %2, %4 : vector<16x128xf32>
    %c0_5 = arith.constant 0 : index
    %c0_6 = arith.constant 0 : index
    %6 = vector.load %arg5[%c0_5, %c0_6] : memref<16x128xf32, #tpu.memory_space<vmem>>, vector<16x128xf32>
    tpu.vector_store %arg5[%c0_5, %c0_6], %5 {strides = array<i32>} : memref<16x128xf32, #tpu.memory_space<vmem>>, vector<16x128xf32>,
    %cst_7 = arith.constant 1.42857146 : f32
    %7 = vector.broadcast %cst_7 : f32 to vector<16x128xf32>
    %8 = arith.mulf %5, %7 : vector<16x128xf32>
    %cst_8 = arith.constant dense<0xFF800000> : vector<16xf32>
    %9 = vector.multi_reduction <maximumf>, %8, %cst_8 [1] : vector<16x128xf32> to vector<16xf32>
    %10 = vector.shape_cast %9 : vector<16xf32> to vector<16x1xf32>
    %11 = vector.broadcast %10 : vector<16x1xf32> to vector<16x128xf32>
    %12 = arith.subf %8, %11 : vector<16x128xf32>
    %13 = math.exp %12 : vector<16x128xf32>
    %cst_9 = arith.constant dense<0.000000e+00> : vector<16xf32>
    %14 = vector.multi_reduction <add>, %13, %cst_9 [1] : vector<16x128xf32> to vector<16xf32>
    %15 = vector.shape_cast %14 : vector<16xf32> to vector<16x1xf32>
    %16 = vector.broadcast %15 : vector<16x1xf32> to vector<16x128xf32>
    %17 = arith.divf %13, %16 : vector<16x128xf32>
    %c0_10 = arith.constant 0 : index
    %c0_11 = arith.constant 0 : index
    %18 = vector.load %arg4[%c0_10, %c0_11] : memref<16x128xf32, #tpu.memory_space<vmem>>, vector<16x128xf32>
    tpu.vector_store %arg4[%c0_10, %c0_11], %17 {strides = array<i32>} : memref<16x128xf32, #tpu.memory_space<vmem>>, vector<16x128xf32>,
    return
  }
  func.func @transform_0(%arg0: i32) -> (i32, i32) {
    %c0_i32 = arith.constant 0 : i32
    %c0_i32_0 = arith.constant 0 : i32
    return %arg0, %c0_i32 : i32, i32
  }
  func.func @transform_1(%arg0: i32) -> (i32, i32) {
    %c0_i32 = arith.constant 0 : i32
    %c0_i32_0 = arith.constant 0 : i32
    %c0_i32_1 = arith.constant 0 : i32
    return %c0_i32, %c0_i32_0 : i32, i32
  }
  func.func @transform_2(%arg0: i32) -> (i32, i32) {
    %c0_i32 = arith.constant 0 : i32
    %c0_i32_0 = arith.constant 0 : i32
    %c0_i32_1 = arith.constant 0 : i32
    return %c0_i32, %c0_i32_0 : i32, i32
  }
  func.func @transform_3(%arg0: i32) -> (i32, i32) {
    %c0_i32 = arith.constant 0 : i32
    %c0_i32_0 = arith.constant 0 : i32
    return %arg0, %c0_i32 : i32, i32
  }
  func.func @transform_4(%arg0: i32) -> (i32, i32) {
    %c0_i32 = arith.constant 0 : i32
    %c0_i32_0 = arith.constant 0 : i32
    return %arg0, %c0_i32 : i32, i32
  }
}

</mosaic_0001>

<llo_original>
// kernel: tpu_custom_call.1
$region0: #{tpu_custom_call.1}
  #allocation0 [shape = 'u32[]', space=smem, size = 0x4, offset = 0x4, fixed_abs, tag = 'smem constant byte address 0x4 - core index']
  #allocation1 [shape = 'u32[144,128]{1,0:T(1,128)}', space=vmem, size = 0x12000, scoped, tag = 'internal scratch']
  %s0 = inlined_call_operand.hbm [shape: bf16[16,96], index: 0, kind: input, shape index: {}]
  %s1 = inlined_call_operand.hbm [shape: bf16[96,128], index: 1, kind: input, shape index: {}]
  %s2 = inlined_call_operand.vmem [shape: f32[1,128], index: 2, kind: input, shape index: {}]
  %s3 = inlined_call_operand.hbm [shape: f32[16,128], index: 3, kind: output, shape index: {0}]
  %s4 = inlined_call_operand.hbm [shape: f32[16,128], index: 4, kind: output, shape index: {1}]
  %5 = xla_tuple %s3, %s4
  %s6 = sld [smem:[#allocation0]]
  $region38: #{tpu_custom_call.1} parent=0
    _
  %s8 = ssub.s32 1, %s6
  %s9 = scalar_select 0, %s8, %s6
  $region1: #{tpu_custom_call.1} parent=0
    #allocation2 [shape = 'u8[4096]{0}', space=vmem, size = 0x1000, scoped, tag = 'input window, operand 0, single buffered']
    #allocation3 [shape = 's32[1]{0}', space=sflag, size = 0x4, scoped, tag = 'scoped memory for tpu_custom_call.1']
    #allocation4 [shape = 's32[1]{0}', space=sflag, size = 0x4, scoped, tag = 'scoped memory for tpu_custom_call.1']
    #allocation5 [shape = 'u8[24576]{0}', space=vmem, size = 0x6000, scoped, tag = 'input window, operand 1, single buffered']
    #allocation6 [shape = 's32[1]{0}', space=sflag, size = 0x4, scoped, tag = 'scoped memory for tpu_custom_call.1']
    #allocation7 [shape = 'u8[8192]{0}', space=vmem, size = 0x2000, scoped, tag = 'output window, operand 0, single buffered']
    #allocation8 [shape = 'u8[8192]{0}', space=vmem, size = 0x2000, scoped, tag = 'output window, operand 1, single buffered']
    #allocation9 [shape = 's32[1]{0}', space=sflag, size = 0x4, scoped, tag = 'scoped memory for tpu_custom_call.1']
    %10 = vsyncpa [#allocation3], 0
    %11 = vsyncpa [#allocation6], 0
    %12 = vsyncpa [#allocation4], 0
    %13 = vsyncpa [#allocation9], 0
    // Predicated region
    $region2: #{tpu_custom_call.1} parent=1 // pred_check
      _
    $region3: #{tpu_custom_call.1} parent=1 // pred_check_branch
      %15 = sbr.rel (0) target = $region5
    $region4: #{tpu_custom_call.1} parent=1 // pred_region
      %s17 = ssub.s32 128, 128
      %18 = vsyncadd [#allocation3], %s17
      %s19 = sshll.u32 [#allocation2], 4
      %s20 = int_to_ptr.vmem [resolvable:$true] %s19
      %25 = dma.hbm_to_vmem [thread:$0]  %s0, 128, %s20, [#allocation3], 64, 64, 4
    $region5: #{tpu_custom_call.1} parent=1 // pred_fallthru
      _
    // Predicated region
    $region6: #{tpu_custom_call.1} parent=1 // pred_check
      _
    $region7: #{tpu_custom_call.1} parent=1 // pred_check_branch
      %27 = sbr.rel (0) target = $region9
    $region8: #{tpu_custom_call.1} parent=1 // pred_region
      %s29 = ssub.s32 768, 768
      %30 = vsyncadd [#allocation6], %s29
      %s31 = sshll.u32 [#allocation5], 4
      %s32 = int_to_ptr.vmem [resolvable:$true] %s31
      %37 = dma.hbm_to_vmem [thread:$0]  %s1, 768, %s32, [#allocation6], 64, 64, 4
    $region9: #{tpu_custom_call.1} parent=1 // pred_fallthru
      _
    // Predicated region
    $region10: #{tpu_custom_call.1} parent=1 // pred_check
      _
    $region11: #{tpu_custom_call.1} parent=1 // pred_check_branch
      %39 = sbr.rel (0) target = $region13
    $region12: #{tpu_custom_call.1} parent=1 // pred_region
      _
    $region13: #{tpu_custom_call.1} parent=1 // pred_fallthru
      _
    // Predicated region
    $region14: #{tpu_custom_call.1} parent=1 // pred_check
      _
    $region15: #{tpu_custom_call.1} parent=1 // pred_check_branch
      %41 = sbr.rel (0) target = $region17
    $region16: #{tpu_custom_call.1} parent=1 // pred_region
      %42 = dma.done [#allocation3], 128
    $region17: #{tpu_custom_call.1} parent=1 // pred_fallthru
      _
    // Predicated region
    $region18: #{tpu_custom_call.1} parent=1 // pred_check
      _
    $region19: #{tpu_custom_call.1} parent=1 // pred_check_branch
      %44 = sbr.rel (0) target = $region21
    $region20: #{tpu_custom_call.1} parent=1 // pred_region
      %45 = dma.done [#allocation6], 768
    $region21: #{tpu_custom_call.1} parent=1 // pred_fallthru
      _
    %v47 = vld [vmem:[#allocation2] sm:$0xf]
    %v48 = vld [vmem:[#allocation2 + $0x4] sm:$0xf]
    %v49 = vld [vmem:[#allocation5] sm:$0xf]
    %v50 = vld [vmem:[#allocation5 + $0x4] sm:$0xf]
    %v51 = vld [vmem:[#allocation5 + $0x8] sm:$0xf]
    %v52 = vld [vmem:[#allocation5 + $0xc] sm:$0xf]
    %v53 = vld [vmem:[#allocation5 + $0x10] sm:$0xf]
    %v54 = vld [vmem:[#allocation5 + $0x14] sm:$0xf]
    %v55 = vld [vmem:[#allocation5 + $0x18] sm:$0xf]
    %v56 = vld [vmem:[#allocation5 + $0x1c] sm:$0xf]
    %v57 = vld [vmem:[#allocation5 + $0x20] sm:$0xf]
    %v58 = vld [vmem:[#allocation5 + $0x24] sm:$0xf]
    %v59 = vld [vmem:[#allocation5 + $0x28] sm:$0xf]
    %v60 = vld [vmem:[#allocation5 + $0x2c] sm:$0xf]
    %v61 = vld [vmem:[%s2] sm:$0x1]
    %v63 = vlaneseq
    %v64 = vshrl.u32 %v63, 7
    %v65 = vsub.s32 0, %v64
    %v66 = vrot.slane %v61, %v65
    %v70 = vunpack.c.l.b16 %v47
    %v71 = vunpack.c.l.b16 %v48
    %v72 = vpack.c.b16 %v71, %v70
    %v85 = vunpack.c.l.b16 %v49
    %v86 = vunpack.c.l.b16 %v50
    %v87 = vunpack.c.l.b16 %v51
    %v88 = vunpack.c.l.b16 %v52
    %v89 = vunpack.c.l.b16 %v53
    %v90 = vunpack.c.l.b16 %v54
    %v91 = vunpack.c.l.b16 %v55
    %v92 = vunpack.c.l.b16 %v56
    %v93 = vunpack.c.l.b16 %v57
    %v94 = vunpack.c.l.b16 %v58
    %v95 = vunpack.c.l.b16 %v59
    %v96 = vunpack.c.l.b16 %v60
    %v97 = vpack.c.b16 %v86, %v85
    %v98 = vpack.c.b16 %v88, %v87
    %v99 = vpack.c.b16 %v90, %v89
    %v100 = vpack.c.b16 %v92, %v91
    %v101 = vpack.c.b16 %v94, %v93
    %v102 = vpack.c.b16 %v96, %v95
    %vm109 = vcmask 785408
    %v111 = vsel %vm109, %v72, 0
    %113 = vmatprep.subr.bf16.mxu0 0
    %114 = vmatpush1.bf16.msra.mxu0 %v97
    %115 = vmatprep.subr.bf16.mxu0 0
    %116 = vmatpush1.bf16.msra.mxu0 %v98
    %117 = vmatprep.subr.bf16.mxu0 0
    %118 = vmatpush1.bf16.msra.mxu0 %v99
    %119 = vmatprep.subr.bf16.mxu0 0
    %120 = vmatpush1.bf16.msra.mxu0 %v100
    %121 = vmatprep.subr.bf16.mxu0 0
    %122 = vmatpush1.bf16.msra.mxu0 %v101
    %123 = vmatprep.subr.bf16.mxu0 0
    %124 = vmatpush1.bf16.msra.mxu0 %v102
    %125 = vmatprep.subr.bf16.mxu0 0
    %126 = vmatpush1.bf16.msra.mxu0 0
    %127 = vmatprep.subr.bf16.mxu0 0
    %128 = vmatpush1.bf16.msra.mxu0 0
    %129 = vmatprep.subr.bf16.mxu0 0
    %130 = vmatpush1.bf16.msra.mxu0 0
    %131 = vmatprep.subr.bf16.mxu0 0
    %132 = vmatpush1.bf16.msra.mxu0 0
    %133 = vmatprep.subr.bf16.mxu0 0
    %134 = vmatpush1.bf16.msra.mxu0 0
    %135 = vmatprep.subr.bf16.mxu0 0
    %136 = vmatpush1.bf16.msra.mxu0 0
    %137 = vmatprep.subr.bf16.mxu0 0
    %138 = vmatpush1.bf16.msra.mxu0 0
    %139 = vmatprep.subr.bf16.mxu0 0
    %140 = vmatpush1.bf16.msra.mxu0 0
    %141 = vmatprep.subr.bf16.mxu0 0
    %142 = vmatpush1.bf16.msra.mxu0 0
    %143 = vmatprep.subr.bf16.mxu0 0
    %144 = vmatpush1.bf16.msra.mxu0 0
    %145 = vmatprep.mubr.bf16.mxu0 0
    %146 = vmatmul.mubr.bf16.gmra.mrb[0].mxu0 %v111
    %v147 = vpop.f32.mrb[0].mxu0
    %v148 = vadd.f32 %v66, %v147
    %v149 = vpop.f32.mrb[0].mxu0
    %v150 = vpop.f32.mrb[0].mxu0
    %v151 = vadd.f32 %v66, %v150
    %v152 = vpop.f32.mrb[0].mxu0
    %153 = vdwg.mxu0
    %154 = vst [vmem:[#allocation8] sm:$0xff] %v148
    %155 = vst [vmem:[#allocation8 + $0x8] sm:$0xff] %v151
    %v156 = vmul.f32 %v148, 1.4285715
    %v157 = vmul.f32 %v151, 1.4285715
    %158 = vmax.xlane.f32.xlu0 %v156
    %v159 = vpop.xlane.xlu0 %158
    %160 = vmax.xlane.f32.xlu0 %v157
    %v161 = vpop.xlane.xlu0 %160
    %v162 = vsub.f32 %v156, %v159
    %v163 = vsub.f32 %v157, %v161
    %v164 = vmul.f32 %v162, 1.442695
    %v165 = vpow.pop %v164
    %v166 = vmul.f32 %v163, 1.442695
    %v167 = vpow.pop %v166
    %168 = vadd.xlane.f32.xlu0 %v165
    %v169 = vpop.xlane.xlu0 %168
    %170 = vadd.xlane.f32.xlu0 %v167
    %v171 = vpop.xlane.xlu0 %170
    %v172 = vrcp.pop %v169
    %v173 = vmul.f32 %v165, %v172
    %v174 = vrcp.pop %v171
    %v175 = vmul.f32 %v167, %v174
    %176 = vst [vmem:[#allocation7] sm:$0xff] %v173
    %177 = vst [vmem:[#allocation7 + $0x8] sm:$0xff] %v175
    // Predicated region
    $region22: #{tpu_custom_call.1} parent=1 // pred_check
      _
    $region23: #{tpu_custom_call.1} parent=1 // pred_check_branch
      %179 = sbr.rel (0) target = $region25
    $region24: #{tpu_custom_call.1} parent=1 // pred_region
      %s181 = ssub.s32 256, 256
      %182 = vsyncadd [#allocation4], %s181
      %s183 = sshll.u32 [#allocation7], 4
      %s184 = int_to_ptr.vmem [resolvable:$true] %s183
      %189 = dma.vmem_to_hbm [thread:$0]  %s184, 256, %s3, [#allocation4], 128, 128, 8
    $region25: #{tpu_custom_call.1} parent=1 // pred_fallthru
      _
    // Predicated region
    $region26: #{tpu_custom_call.1} parent=1 // pred_check
      _
    $region27: #{tpu_custom_call.1} parent=1 // pred_check_branch
      %191 = sbr.rel (0) target = $region29
    $region28: #{tpu_custom_call.1} parent=1 // pred_region
      %s193 = ssub.s32 256, 256
      %194 = vsyncadd [#allocation9], %s193
      %s195 = sshll.u32 [#allocation8], 4
      %s196 = int_to_ptr.vmem [resolvable:$true] %s195
      %201 = dma.vmem_to_hbm [thread:$0]  %s196, 256, %s4, [#allocation9], 128, 128, 8
    $region29: #{tpu_custom_call.1} parent=1 // pred_fallthru
      _
    // Predicated region
    $region30: #{tpu_custom_call.1} parent=1 // pred_check
      _
    $region31: #{tpu_custom_call.1} parent=1 // pred_check_branch
      %203 = sbr.rel (0) target = $region33
    $region32: #{tpu_custom_call.1} parent=1 // pred_region
      %204 = dma.done [#allocation4], 256
    $region33: #{tpu_custom_call.1} parent=1 // pred_fallthru
      _
    // Predicated region
    $region34: #{tpu_custom_call.1} parent=1 // pred_check
      _
    $region35: #{tpu_custom_call.1} parent=1 // pred_check_branch
      %206 = sbr.rel (0) target = $region37
    $region36: #{tpu_custom_call.1} parent=1 // pred_region
      %207 = dma.done [#allocation9], 256
    $region37: #{tpu_custom_call.1} parent=1 // pred_fallthru
      _
    %208 = vsyncpa [#allocation3], 1
    %209 = vsyncpa [#allocation6], 1
    %210 = vsyncpa [#allocation4], 1
    %211 = vsyncpa [#allocation9], 1

</llo_original>
